<compile_context>
chip_gen: v5e
topology: v5e:2x2
jax: 0.10.0
libtpu: 0.0.40
codegen_flags: <defaults>
</compile_context>

<pallas_src>
import functools

import jax
import jax.numpy as jnp
import numpy as np
from jax.experimental import pallas as pl
from jax.experimental.pallas import tpu as pltpu

LOG_STD_MAX = 2.0
LOG_STD_MIN = -5.0

IN_DIM = 5            # np.array([5]).prod()
IN_DIM_PAD = 8        # pad K of fc1 to a clean sublane multiple
HIDDEN = 256
OUT_DIM = 1           # np.prod([1])
HEAD_DIM = 2          # fused heads: row 0 = mean, row 1 = log_std

_LS_SCALE = 0.5 * (LOG_STD_MAX - LOG_STD_MIN)   # 3.5
_LS_SHIFT = 0.5 * (LOG_STD_MAX + LOG_STD_MIN)   # -1.5
# LOG_STD_MIN + 0.5*(MAX-MIN)*(t+1) == _LS_SCALE * t + _LS_SHIFT


def _round_up(n, m):
    return ((n + m - 1) // m) * m


def _batch_tiling(b):
    """Returns (b_pad, tile). tile==b_pad -> single full-extent block."""
    b16 = _round_up(max(b, 1), 16)
    if b16 <= 1024:
        return b16, b16                       # grid = 1, no (8,128) issue (full extent)
    tile = 2048 if b16 >= 8192 else 1024      # multiple of 128 (lane-dense out block)
    return _round_up(b16, tile), tile


def _actor_kernel(x_ref, w1_ref, b1_ref, w2_ref, b2_ref, wht_ref, bht_ref,
                  out_ref):
    # fc1 + relu (bf16 MXU operands, f32 accumulate, f32 epilogue)
    x = x_ref[...].astype(jnp.bfloat16)                               # (TB, 8)
    h1 = jnp.dot(x, w1_ref[...], preferred_element_type=jnp.float32)
    h1 = jnp.maximum(h1 + b1_ref[...], 0.0)                           # (TB, 256) f32

    # fc2 + relu
    h2 = jnp.dot(h1.astype(jnp.bfloat16), w2_ref[...],
                 preferred_element_type=jnp.float32)
    h2 = jnp.maximum(h2 + b2_ref[...], 0.0)                           # (TB, 256) f32

    # fused heads, lane-dense transposed result:
    #   (2, 256) x (TB, 256)^T  ->  (2, TB)    (row 0 = mean, row 1 = log_std)
    head = jax.lax.dot_general(
        wht_ref[...], h2.astype(jnp.bfloat16),
        dimension_numbers=(((1,), (1,)), ((), ())),
        preferred_element_type=jnp.float32)
    head = head + bht_ref[...]                                        # (2,1) bcast

    row = jax.lax.broadcasted_iota(jnp.int32, head.shape, 0)
    rescaled = _LS_SCALE * jnp.tanh(head) + _LS_SHIFT                 # log_std path
    out_ref[...] = jnp.where(row == 0, head, rescaled).astype(out_ref.dtype)


def prepare_params(params):
    """One-time parameter prep (pad/cast/fuse) -- keep OUT of the per-call path."""
    w1, b1, w2, b2, wm, bm, ws, bs = params
    w1p = jnp.pad(w1, ((0, IN_DIM_PAD - IN_DIM), (0, 0))).astype(jnp.bfloat16)
    w2p = w2.astype(jnp.bfloat16)
    whT = jnp.concatenate([wm, ws], axis=1).T.astype(jnp.bfloat16)    # (2, 256)
    bhT = jnp.concatenate([bm, bs], axis=1).T                         # (2, 1) f32
    return (w1p, b1, w2p, b2, whT, bhT)


@jax.jit
def actor_forward(x, prepared_params):
    """x: (B, 5) float32; prepared_params from prepare_params().

    Returns (mean, log_std), each (B, 1) float32.
    """
    w1p, b1, w2p, b2, whT, bhT = prepared_params
    B = x.shape[0]

    b_pad, tile = _batch_tiling(B)
    nb = b_pad // tile

    xp = jnp.pad(x, ((0, b_pad - B), (0, IN_DIM_PAD - IN_DIM)))

    out = pl.pallas_call(
        _actor_kernel,
        out_shape=jax.ShapeDtypeStruct((HEAD_DIM, b_pad), jnp.float32),
        grid=(nb,),
        in_specs=[
            pl.BlockSpec((tile, IN_DIM_PAD), lambda i: (i, 0)),       # x tile
            pl.BlockSpec((IN_DIM_PAD, HIDDEN), lambda i: (0, 0)),     # W1 (resident)
            pl.BlockSpec((1, HIDDEN), lambda i: (0, 0)),              # b1
            pl.BlockSpec((HIDDEN, HIDDEN), lambda i: (0, 0)),         # W2 (resident)
            pl.BlockSpec((1, HIDDEN), lambda i: (0, 0)),              # b2
            pl.BlockSpec((HEAD_DIM, HIDDEN), lambda i: (0, 0)),       # W_head^T (resident)
            pl.BlockSpec((HEAD_DIM, 1), lambda i: (0, 0)),            # b_head^T
        ],
        out_specs=pl.BlockSpec((HEAD_DIM, tile), lambda i: (0, i)),   # lane-dense
        compiler_params=pltpu.CompilerParams(
            dimension_semantics=("parallel",)),
    )(xp, w1p, b1, w2p, b2, whT, bhT)

    mean = out[0, :B][:, None]                                        # (B, 1)
    log_std = out[1, :B][:, None]                                     # (B, 1)
    return mean, log_std


def init_params(key):
    """Deterministic init mimicking PyTorch nn.Linear (uniform +-1/sqrt(fan_in)).

    Weights stored as (in_features, out_features); biases as (1, out_features).
    """
    def linear(key, fan_in, fan_out):
        kw, kb = jax.random.split(key)
        bound = 1.0 / np.sqrt(fan_in)
        w = jax.random.uniform(kw, (fan_in, fan_out), jnp.float32, -bound, bound)
        b = jax.random.uniform(kb, (1, fan_out), jnp.float32, -bound, bound)
        return w, b

    k1, k2, k3, k4 = jax.random.split(key, 4)
    w1, b1 = linear(k1, IN_DIM, HIDDEN)
    w2, b2 = linear(k2, HIDDEN, HIDDEN)
    wm, bm = linear(k3, HIDDEN, OUT_DIM)
    ws, bs = linear(k4, HIDDEN, OUT_DIM)
    return (w1, b1, w2, b2, wm, bm, ws, bs)


def actor_forward_ref(x, params):
    """Pure-JAX reference with the same bf16-operand / f32-accumulate math."""
    w1, b1, w2, b2, wm, bm, ws, bs = params
    bf = jnp.bfloat16
    f32 = jnp.float32
    h1 = jax.nn.relu(jnp.dot(x.astype(bf), w1.astype(bf),
                             preferred_element_type=f32) + b1)
    h2 = jax.nn.relu(jnp.dot(h1.astype(bf), w2.astype(bf),
                             preferred_element_type=f32) + b2)
    mean = jnp.dot(h2.astype(bf), wm.astype(bf), preferred_element_type=f32) + bm
    ls = jnp.tanh(jnp.dot(h2.astype(bf), ws.astype(bf),
                          preferred_element_type=f32) + bs)
    ls = LOG_STD_MIN + 0.5 * (LOG_STD_MAX - LOG_STD_MIN) * (ls + 1.0)
    return mean, ls


def _check(x, params, prepared):
    mean, log_std = actor_forward(x, prepared)
    jax.block_until_ready((mean, log_std))
    mean_ref, log_std_ref = actor_forward_ref(x, params)
    np.testing.assert_allclose(np.asarray(mean), np.asarray(mean_ref),
                               rtol=2e-3, atol=2e-3)
    np.testing.assert_allclose(np.asarray(log_std), np.asarray(log_std_ref),
                               rtol=2e-3, atol=2e-3)
    assert mean.shape == (x.shape[0], OUT_DIM)
    assert log_std.shape == (x.shape[0], OUT_DIM)


if __name__ == "__main__":
    key = jax.random.PRNGKey(0)
    kp, kx1, kx2 = jax.random.split(key, 3)

    params = init_params(kp)
    prepared = prepare_params(params)          # one-time prep, outside forward

    # Small-batch path: single full-extent block (grid = 1, no padding to 256).
    x_small = jax.random.normal(kx1, (8, IN_DIM), jnp.float32)
    _check(x_small, params, prepared)

    # Large-batch path: tiled grid (nb >= 2) with lane-dense transposed output.
    x_big = jax.random.normal(kx2, (1200, IN_DIM), jnp.float32)
    _check(x_big, params, prepared)

    print("KERNEL_OK")
</pallas_src>

<mosaic_0001>
module attributes {stable_mosaic.version = 11 : i64} {
  func.func @_actor_kernel(%arg0: i32, %arg1: memref<16x8xf32, #tpu.memory_space<vmem>>, %arg2: memref<8x256xbf16, #tpu.memory_space<vmem>>, %arg3: memref<1x256xf32, #tpu.memory_space<vmem>>, %arg4: memref<256x256xbf16, #tpu.memory_space<vmem>>, %arg5: memref<1x256xf32, #tpu.memory_space<vmem>>, %arg6: memref<2x256xbf16, #tpu.memory_space<vmem>>, %arg7: memref<2x1xf32, #tpu.memory_space<vmem>>, %arg8: memref<2x16xf32, #tpu.memory_space<vmem>>) attributes {dimension_semantics = [#tpu.dimension_semantics<parallel>], iteration_bounds = array<i64: 1>, scalar_prefetch = 0 : i64, scratch_operands = 0 : i64, tpu.core_type = #tpu.core_type<tc>, window_params = [{transform_indices = @transform_0, window_bounds = array<i64: 16, 8>}, {pipeline_mode = #tpu.pipeline_mode<synchronous>, transform_indices = @transform_1, window_bounds = array<i64: 8, 256>}, {pipeline_mode = #tpu.pipeline_mode<synchronous>, transform_indices = @transform_2, window_bounds = array<i64: 1, 256>}, {pipeline_mode = #tpu.pipeline_mode<synchronous>, transform_indices = @transform_3, window_bounds = array<i64: 256, 256>}, {pipeline_mode = #tpu.pipeline_mode<synchronous>, transform_indices = @transform_4, window_bounds = array<i64: 1, 256>}, {pipeline_mode = #tpu.pipeline_mode<synchronous>, transform_indices = @transform_5, window_bounds = array<i64: 2, 256>}, {pipeline_mode = #tpu.pipeline_mode<synchronous>, transform_indices = @transform_6, window_bounds = array<i64: 2, 1>}, {transform_indices = @transform_7, window_bounds = array<i64: 2, 16>}]} {
    %c0 = arith.constant 0 : index
    %c0_0 = arith.constant 0 : index
    %0 = vector.load %arg1[%c0, %c0_0] : memref<16x8xf32, #tpu.memory_space<vmem>>, vector<16x8xf32>
    %1 = arith.truncf %0 : vector<16x8xf32> to vector<16x8xbf16>
    %c0_1 = arith.constant 0 : index
    %c0_2 = arith.constant 0 : index
    %2 = vector.load %arg2[%c0_1, %c0_2] : memref<8x256xbf16, #tpu.memory_space<vmem>>, vector<8x256xbf16>
    %cst = arith.constant dense<0.000000e+00> : vector<16x256xf32>
    %3 = tpu.matmul %1, %2, %cst {dimension_numbers = #tpu.dot_dimension_numbers<[1], [0], [0], [1], [0, 0, 1, 1], [], []>} : vector<16x8xbf16>, vector<8x256xbf16>, vector<16x256xf32> -> vector<16x256xf32>
    %c0_3 = arith.constant 0 : index
    %c0_4 = arith.constant 0 : index
    %4 = vector.load %arg3[%c0_3, %c0_4] : memref<1x256xf32, #tpu.memory_space<vmem>>, vector<1x256xf32>
    %5 = vector.broadcast %4 : vector<1x256xf32> to vector<16x256xf32>
    %6 = arith.addf %3, %5 : vector<16x256xf32>
    %cst_5 = arith.constant 0.000000e+00 : f32
    %7 = vector.broadcast %cst_5 : f32 to vector<16x256xf32>
    %8 = arith.maximumf %6, %7 : vector<16x256xf32>
    %9 = arith.truncf %8 : vector<16x256xf32> to vector<16x256xbf16>
    %c0_6 = arith.constant 0 : index
    %c0_7 = arith.constant 0 : index
    %10 = vector.load %arg4[%c0_6, %c0_7] : memref<256x256xbf16, #tpu.memory_space<vmem>>, vector<256x256xbf16>
    %cst_8 = arith.constant dense<0.000000e+00> : vector<16x256xf32>
    %11 = tpu.matmul %9, %10, %cst_8 {dimension_numbers = #tpu.dot_dimension_numbers<[1], [0], [0], [1], [0, 0, 1, 1], [], []>} : vector<16x256xbf16>, vector<256x256xbf16>, vector<16x256xf32> -> vector<16x256xf32>
    %c0_9 = arith.constant 0 : index
    %c0_10 = arith.constant 0 : index
    %12 = vector.load %arg5[%c0_9, %c0_10] : memref<1x256xf32, #tpu.memory_space<vmem>>, vector<1x256xf32>
    %13 = vector.broadcast %12 : vector<1x256xf32> to vector<16x256xf32>
    %14 = arith.addf %11, %13 : vector<16x256xf32>
    %cst_11 = arith.constant 0.000000e+00 : f32
    %15 = vector.broadcast %cst_11 : f32 to vector<16x256xf32>
    %16 = arith.maximumf %14, %15 : vector<16x256xf32>
    %c0_12 = arith.constant 0 : index
    %c0_13 = arith.constant 0 : index
    %17 = vector.load %arg6[%c0_12, %c0_13] : memref<2x256xbf16, #tpu.memory_space<vmem>>, vector<2x256xbf16>
    %18 = arith.truncf %16 : vector<16x256xf32> to vector<16x256xbf16>
    %cst_14 = arith.constant dense<0.000000e+00> : vector<2x16xf32>
    %19 = tpu.matmul %17, %18, %cst_14 {dimension_numbers = #tpu.dot_dimension_numbers<[1], [1], [0], [0], [0, 0, 1, 0], [], []>} : vector<2x256xbf16>, vector<16x256xbf16>, vector<2x16xf32> -> vector<2x16xf32>
    %c0_15 = arith.constant 0 : index
    %c0_16 = arith.constant 0 : index
    %20 = vector.load %arg7[%c0_15, %c0_16] : memref<2x1xf32, #tpu.memory_space<vmem>>, vector<2x1xf32>
    %21 = vector.broadcast %20 : vector<2x1xf32> to vector<2x16xf32>
    %22 = arith.addf %19, %21 : vector<2x16xf32>
    %23 = tpu.iota {dimensions = array<i32: 0>} : vector<2x16xi32>
    %24 = math.tanh %22 : vector<2x16xf32>
    %cst_17 = arith.constant 3.500000e+00 : f32
    %25 = vector.broadcast %cst_17 : f32 to vector<2x16xf32>
    %26 = arith.mulf %25, %24 : vector<2x16xf32>
    %cst_18 = arith.constant -1.500000e+00 : f32
    %27 = vector.broadcast %cst_18 : f32 to vector<2x16xf32>
    %28 = arith.addf %26, %27 : vector<2x16xf32>
    %c0_i32 = arith.constant 0 : i32
    %29 = vector.broadcast %c0_i32 : i32 to vector<2x16xi32>
    %30 = arith.cmpi eq, %23, %29 : vector<2x16xi32>
    %31 = arith.select %30, %22, %28 : vector<2x16xi1>, vector<2x16xf32>
    %c0_19 = arith.constant 0 : index
    %c0_20 = arith.constant 0 : index
    %32 = vector.load %arg8[%c0_19, %c0_20] : memref<2x16xf32, #tpu.memory_space<vmem>>, vector<2x16xf32>
    tpu.vector_store %arg8[%c0_19, %c0_20], %31 {strides = array<i32>} : memref<2x16xf32, #tpu.memory_space<vmem>>, vector<2x16xf32>,
    return
  }
  func.func @transform_0(%arg0: i32) -> (i32, i32) {
    %c0_i32 = arith.constant 0 : i32
    %c0_i32_0 = arith.constant 0 : i32
    return %arg0, %c0_i32 : i32, i32
  }
  func.func @transform_1(%arg0: i32) -> (i32, i32) {
    %c0_i32 = arith.constant 0 : i32
    %c0_i32_0 = arith.constant 0 : i32
    %c0_i32_1 = arith.constant 0 : i32
    return %c0_i32, %c0_i32_0 : i32, i32
  }
  func.func @transform_2(%arg0: i32) -> (i32, i32) {
    %c0_i32 = arith.constant 0 : i32
    %c0_i32_0 = arith.constant 0 : i32
    %c0_i32_1 = arith.constant 0 : i32
    return %c0_i32, %c0_i32_0 : i32, i32
  }
  func.func @transform_3(%arg0: i32) -> (i32, i32) {
    %c0_i32 = arith.constant 0 : i32
    %c0_i32_0 = arith.constant 0 : i32
    %c0_i32_1 = arith.constant 0 : i32
    return %c0_i32, %c0_i32_0 : i32, i32
  }
  func.func @transform_4(%arg0: i32) -> (i32, i32) {
    %c0_i32 = arith.constant 0 : i32
    %c0_i32_0 = arith.constant 0 : i32
    %c0_i32_1 = arith.constant 0 : i32
    return %c0_i32, %c0_i32_0 : i32, i32
  }
  func.func @transform_5(%arg0: i32) -> (i32, i32) {
    %c0_i32 = arith.constant 0 : i32
    %c0_i32_0 = arith.constant 0 : i32
    %c0_i32_1 = arith.constant 0 : i32
    return %c0_i32, %c0_i32_0 : i32, i32
  }
  func.func @transform_6(%arg0: i32) -> (i32, i32) {
    %c0_i32 = arith.constant 0 : i32
    %c0_i32_0 = arith.constant 0 : i32
    %c0_i32_1 = arith.constant 0 : i32
    return %c0_i32, %c0_i32_0 : i32, i32
  }
  func.func @transform_7(%arg0: i32) -> (i32, i32) {
    %c0_i32 = arith.constant 0 : i32
    %c0_i32_0 = arith.constant 0 : i32
    return %c0_i32, %arg0 : i32, i32
  }
}

</mosaic_0001>

<llo_original>
// kernel: actor_forward.1
$region0: #{actor_forward.1}
  #allocation0 [shape = 'u32[]', space=smem, size = 0x4, offset = 0x4, fixed_abs, tag = 'smem constant byte address 0x4 - core index']
  #allocation1 [shape = 'u32[72,128]{1,0:T(1,128)}', space=vmem, size = 0x9000, scoped, tag = 'internal scratch']
  %s0 = inlined_call_operand.vmem [shape: f32[16,8], index: 0, kind: input, shape index: {}]
  %s1 = inlined_call_operand.vmem [shape: bf16[8,256], index: 1, kind: input, shape index: {}]
  %s2 = inlined_call_operand.vmem [shape: f32[1,256], index: 2, kind: input, shape index: {}]
  %s3 = inlined_call_operand.hbm [shape: bf16[256,256], index: 3, kind: input, shape index: {}]
  %s4 = inlined_call_operand.vmem [shape: f32[1,256], index: 4, kind: input, shape index: {}]
  %s5 = inlined_call_operand.vmem [shape: bf16[2,256], index: 5, kind: input, shape index: {}]
  %s6 = inlined_call_operand.vmem [shape: f32[2,1], index: 6, kind: input, shape index: {}]
  %s7 = inlined_call_operand.vmem [shape: f32[2,16], index: 7, kind: output, shape index: {}]
  %s8 = sld [smem:[#allocation0]]
  $region42: #{actor_forward.1} parent=0
    _
  %s10 = ssub.s32 1, %s8
  %s11 = scalar_select 0, %s10, %s8
  $region1: #{actor_forward.1} parent=0
    #allocation2 [shape = 'u8[131072]{0}', space=vmem, size = 0x20000, scoped, tag = 'input window, operand 3, single buffered']
    #allocation3 [shape = 's32[1]{0}', space=sflag, size = 0x4, scoped, tag = 'scoped memory for actor_forward.1']
    %12 = vsyncpa [#allocation3], 0
    // Predicated region
    $region2: #{actor_forward.1} parent=1 // pred_check
      _
    $region3: #{actor_forward.1} parent=1 // pred_check_branch
      %14 = sbr.rel (0) target = $region5
    $region4: #{actor_forward.1} parent=1 // pred_region
      _
    $region5: #{actor_forward.1} parent=1 // pred_fallthru
      _
    // Predicated region
    $region6: #{actor_forward.1} parent=1 // pred_check
      _
    $region7: #{actor_forward.1} parent=1 // pred_check_branch
      %16 = sbr.rel (0) target = $region9
    $region8: #{actor_forward.1} parent=1 // pred_region
      _
    $region9: #{actor_forward.1} parent=1 // pred_fallthru
      _
    // Predicated region
    $region10: #{actor_forward.1} parent=1 // pred_check
      _
    $region11: #{actor_forward.1} parent=1 // pred_check_branch
      %18 = sbr.rel (0) target = $region13
    $region12: #{actor_forward.1} parent=1 // pred_region
      _
    $region13: #{actor_forward.1} parent=1 // pred_fallthru
      _
    // Predicated region
    $region14: #{actor_forward.1} parent=1 // pred_check
      _
    $region15: #{actor_forward.1} parent=1 // pred_check_branch
      %20 = sbr.rel (0) target = $region17
    $region16: #{actor_forward.1} parent=1 // pred_region
      %22 = vsyncadd [#allocation3], 0
      %s23 = sshll.u32 %s3, 4
      %s24 = int_to_ptr.hbm [resolvable:$true] %s23
      %s25 = sshll.u32 [#allocation2], 4
      %s26 = int_to_ptr.vmem [resolvable:$true] %s25
      %31 = dma.hbm_to_vmem [thread:$0]  %s24, 4096, %s26, [#allocation3], 128, 128, 8
    $region17: #{actor_forward.1} parent=1 // pred_fallthru
      _
    // Predicated region
    $region18: #{actor_forward.1} parent=1 // pred_check
      _
    $region19: #{actor_forward.1} parent=1 // pred_check_branch
      %33 = sbr.rel (0) target = $region21
    $region20: #{actor_forward.1} parent=1 // pred_region
      _
    $region21: #{actor_forward.1} parent=1 // pred_fallthru
      _
    // Predicated region
    $region22: #{actor_forward.1} parent=1 // pred_check
      _
    $region23: #{actor_forward.1} parent=1 // pred_check_branch
      %35 = sbr.rel (0) target = $region25
    $region24: #{actor_forward.1} parent=1 // pred_region
      _
    $region25: #{actor_forward.1} parent=1 // pred_fallthru
      _
    // Predicated region
    $region26: #{actor_forward.1} parent=1 // pred_check
      _
    $region27: #{actor_forward.1} parent=1 // pred_check_branch
      %37 = sbr.rel (0) target = $region29
    $region28: #{actor_forward.1} parent=1 // pred_region
      _
    $region29: #{actor_forward.1} parent=1 // pred_fallthru
      _
    // Predicated region
    $region30: #{actor_forward.1} parent=1 // pred_check
      _
    $region31: #{actor_forward.1} parent=1 // pred_check_branch
      %39 = sbr.rel (0) target = $region33
    $region32: #{actor_forward.1} parent=1 // pred_region
      %41 = dma.done [#allocation3], 4096
    $region33: #{actor_forward.1} parent=1 // pred_fallthru
      _
    %v43 = vld [vmem:[%s0] sm:$0xff]
    %v44 = vld [vmem:[%s0 + $0x8] sm:$0xff]
    %v45 = vpack.c.bf16 %v44, %v43
    %v46 = vld [vmem:[%s1] sm:$0xff]
    %v47 = vld [vmem:[%s2] sm:$0x3]
    %v49 = vperm.slane %v47, 0
    %v50 = vperm.slane %v47, 1
    %v54 = vunpack.c.l.b16 %v46
    %v55 = vunpack.c.h.b16 %v46
    %v56 = vpack.c.b16 %v54, %v54
    %v57 = vpack.c.b16 %v55, %v55
    %vm58 = vcmask 64512
    %v60 = vsel %vm58, %v45, 0
    %vm62 = vcmask 1043456
    %v64 = vsel %vm62, %v56, 0
    %v67 = vsel %vm62, %v57, 0
    %69 = vmatpush.bf16.msra.mxu0 0
    %70 = vmatpush.bf16.msra.mxu0 0
    %71 = vmatpush.bf16.msra.mxu0 0
    %72 = vmatpush.bf16.msra.mxu0 0
    %73 = vmatpush.bf16.msra.mxu0 0
    %74 = vmatpush.bf16.msra.mxu0 0
    %75 = vmatpush.bf16.msra.mxu0 0
    %76 = vmatpush.bf16.msra.mxu0 %v64
    %77 = vmatmul.bf16.gmra.mxu0 %v60
    %v78 = vpop.f32.mrf.mxu0
    %v79 = vadd.f32 %v49, %v78
    %v80 = vpop.f32.mrf.mxu0
    %v81 = vadd.f32 %v49, %v80
    %82 = vdwg.mxu0
    %83 = vmatpush.bf16.msra.mxu0 0
    %84 = vmatpush.bf16.msra.mxu0 0
    %85 = vmatpush.bf16.msra.mxu0 0
    %86 = vmatpush.bf16.msra.mxu0 0
    %87 = vmatpush.bf16.msra.mxu0 0
    %88 = vmatpush.bf16.msra.mxu0 0
    %89 = vmatpush.bf16.msra.mxu0 0
    %90 = vmatpush.bf16.msra.mxu0 %v67
    %91 = vmatmul.bf16.gmra.mxu0 %v60
    %v92 = vpop.f32.mrf.mxu0
    %v93 = vadd.f32 %v50, %v92
    %v94 = vpop.f32.mrf.mxu0
    %v95 = vadd.f32 %v50, %v94
    %96 = vdwg.mxu0
    %v97 = vmax.f32 %v79, 0.0
    %v98 = vmax.f32 %v93, 0.0
    %v99 = vmax.f32 %v81, 0.0
    %v100 = vmax.f32 %v95, 0.0
    %v101 = vpack.c.bf16 %v99, %v97
    %v102 = vpack.c.bf16 %v100, %v98
    %v103 = vld [vmem:[#allocation2] sm:$0xff]
    %v104 = vld [vmem:[#allocation2 + $0x8] sm:$0xff]
    %v105 = vld [vmem:[#allocation2 + $0x10] sm:$0xff]
    %v106 = vld [vmem:[#allocation2 + $0x18] sm:$0xff]
    %v107 = vld [vmem:[#allocation2 + $0x20] sm:$0xff]
    %v108 = vld [vmem:[#allocation2 + $0x28] sm:$0xff]
    %v109 = vld [vmem:[#allocation2 + $0x30] sm:$0xff]
    %v110 = vld [vmem:[#allocation2 + $0x38] sm:$0xff]
    %v111 = vld [vmem:[#allocation2 + $0x40] sm:$0xff]
    %v112 = vld [vmem:[#allocation2 + $0x48] sm:$0xff]
    %v113 = vld [vmem:[#allocation2 + $0x50] sm:$0xff]
    %v114 = vld [vmem:[#allocation2 + $0x58] sm:$0xff]
    %v115 = vld [vmem:[#allocation2 + $0x60] sm:$0xff]
    %v116 = vld [vmem:[#allocation2 + $0x68] sm:$0xff]
    %v117 = vld [vmem:[#allocation2 + $0x70] sm:$0xff]
    %v118 = vld [vmem:[#allocation2 + $0x78] sm:$0xff]
    %v119 = vld [vmem:[#allocation2 + $0x80] sm:$0xff]
    %v120 = vld [vmem:[#allocation2 + $0x88] sm:$0xff]
    %v121 = vld [vmem:[#allocation2 + $0x90] sm:$0xff]
    %v122 = vld [vmem:[#allocation2 + $0x98] sm:$0xff]
    %v123 = vld [vmem:[#allocation2 + $0xa0] sm:$0xff]
    %v124 = vld [vmem:[#allocation2 + $0xa8] sm:$0xff]
    %v125 = vld [vmem:[#allocation2 + $0xb0] sm:$0xff]
    %v126 = vld [vmem:[#allocation2 + $0xb8] sm:$0xff]
    %v127 = vld [vmem:[#allocation2 + $0xc0] sm:$0xff]
    %v128 = vld [vmem:[#allocation2 + $0xc8] sm:$0xff]
    %v129 = vld [vmem:[#allocation2 + $0xd0] sm:$0xff]
    %v130 = vld [vmem:[#allocation2 + $0xd8] sm:$0xff]
    %v131 = vld [vmem:[#allocation2 + $0xe0] sm:$0xff]
    %v132 = vld [vmem:[#allocation2 + $0xe8] sm:$0xff]
    %v133 = vld [vmem:[#allocation2 + $0xf0] sm:$0xff]
    %v134 = vld [vmem:[#allocation2 + $0xf8] sm:$0xff]
    %v135 = vld [vmem:[%s4] sm:$0x3]
    %v137 = vperm.slane %v135, 0
    %v138 = vperm.slane %v135, 1
    %v173 = vunpack.c.l.b16 %v103
    %v174 = vunpack.c.h.b16 %v103
    %v175 = vunpack.c.l.b16 %v104
    %v176 = vunpack.c.h.b16 %v104
    %v177 = vunpack.c.l.b16 %v105
    %v178 = vunpack.c.h.b16 %v105
    %v179 = vunpack.c.l.b16 %v106
    %v180 = vunpack.c.h.b16 %v106
    %v181 = vunpack.c.l.b16 %v107
    %v182 = vunpack.c.h.b16 %v107
    %v183 = vunpack.c.l.b16 %v108
    %v184 = vunpack.c.h.b16 %v108
    %v185 = vunpack.c.l.b16 %v109
    %v186 = vunpack.c.h.b16 %v109
    %v187 = vunpack.c.l.b16 %v110
    %v188 = vunpack.c.h.b16 %v110
    %v189 = vunpack.c.l.b16 %v111
    %v190 = vunpack.c.h.b16 %v111
    %v191 = vunpack.c.l.b16 %v112
    %v192 = vunpack.c.h.b16 %v112
    %v193 = vunpack.c.l.b16 %v113
    %v194 = vunpack.c.h.b16 %v113
    %v195 = vunpack.c.l.b16 %v114
    %v196 = vunpack.c.h.b16 %v114
    %v197 = vunpack.c.l.b16 %v115
    %v198 = vunpack.c.h.b16 %v115
    %v199 = vunpack.c.l.b16 %v116
    %v200 = vunpack.c.h.b16 %v116
    %v201 = vunpack.c.l.b16 %v117
    %v202 = vunpack.c.h.b16 %v117
    %v203 = vunpack.c.l.b16 %v118
    %v204 = vunpack.c.h.b16 %v118
    %v205 = vunpack.c.l.b16 %v119
    %v206 = vunpack.c.h.b16 %v119
    %v207 = vunpack.c.l.b16 %v120
    %v208 = vunpack.c.h.b16 %v120
    %v209 = vunpack.c.l.b16 %v121
    %v210 = vunpack.c.h.b16 %v121
    %v211 = vunpack.c.l.b16 %v122
    %v212 = vunpack.c.h.b16 %v122
    %v213 = vunpack.c.l.b16 %v123
    %v214 = vunpack.c.h.b16 %v123
    %v215 = vunpack.c.l.b16 %v124
    %v216 = vunpack.c.h.b16 %v124
    %v217 = vunpack.c.l.b16 %v125
    %v218 = vunpack.c.h.b16 %v125
    %v219 = vunpack.c.l.b16 %v126
    %v220 = vunpack.c.h.b16 %v126
    %v221 = vunpack.c.l.b16 %v127
    %v222 = vunpack.c.h.b16 %v127
    %v223 = vunpack.c.l.b16 %v128
    %v224 = vunpack.c.h.b16 %v128
    %v225 = vunpack.c.l.b16 %v129
    %v226 = vunpack.c.h.b16 %v129
    %v227 = vunpack.c.l.b16 %v130
    %v228 = vunpack.c.h.b16 %v130
    %v229 = vunpack.c.l.b16 %v131
    %v230 = vunpack.c.h.b16 %v131
    %v231 = vunpack.c.l.b16 %v132
    %v232 = vunpack.c.h.b16 %v132
    %v233 = vunpack.c.l.b16 %v133
    %v234 = vunpack.c.h.b16 %v133
    %v235 = vunpack.c.l.b16 %v134
    %v236 = vunpack.c.h.b16 %v134
    %v237 = vpack.c.b16 %v175, %v173
    %v238 = vpack.c.b16 %v176, %v174
    %v239 = vpack.c.b16 %v179, %v177
    %v240 = vpack.c.b16 %v180, %v178
    %v241 = vpack.c.b16 %v183, %v181
    %v242 = vpack.c.b16 %v184, %v182
    %v243 = vpack.c.b16 %v187, %v185
    %v244 = vpack.c.b16 %v188, %v186
    %v245 = vpack.c.b16 %v191, %v189
    %v246 = vpack.c.b16 %v192, %v190
    %v247 = vpack.c.b16 %v195, %v193
    %v248 = vpack.c.b16 %v196, %v194
    %v249 = vpack.c.b16 %v199, %v197
    %v250 = vpack.c.b16 %v200, %v198
    %v251 = vpack.c.b16 %v203, %v201
    %v252 = vpack.c.b16 %v204, %v202
    %v253 = vpack.c.b16 %v207, %v205
    %v254 = vpack.c.b16 %v208, %v206
    %v255 = vpack.c.b16 %v211, %v209
    %v256 = vpack.c.b16 %v212, %v210
    %v257 = vpack.c.b16 %v215, %v213
    %v258 = vpack.c.b16 %v216, %v214
    %v259 = vpack.c.b16 %v219, %v217
    %v260 = vpack.c.b16 %v220, %v218
    %v261 = vpack.c.b16 %v223, %v221
    %v262 = vpack.c.b16 %v224, %v222
    %v263 = vpack.c.b16 %v227, %v225
    %v264 = vpack.c.b16 %v228, %v226
    %v265 = vpack.c.b16 %v231, %v229
    %v266 = vpack.c.b16 %v232, %v230
    %v267 = vpack.c.b16 %v235, %v233
    %v268 = vpack.c.b16 %v236, %v234
    %301 = vmatpush.bf16.msra.mxu0 %v251
    %302 = vmatpush.bf16.msra.mxu0 %v249
    %303 = vmatpush.bf16.msra.mxu0 %v247
    %304 = vmatpush.bf16.msra.mxu0 %v245
    %305 = vmatpush.bf16.msra.mxu0 %v243
    %306 = vmatpush.bf16.msra.mxu0 %v241
    %307 = vmatpush.bf16.msra.mxu0 %v239
    %308 = vmatpush.bf16.msra.mxu0 %v237
    %309 = vmatmul.bf16.gmra.mxu0 %v101
    %v310 = vpop.f32.mrf.mxu0
    %v311 = vadd.f32 %v137, %v310
    %v312 = vpop.f32.mrf.mxu0
    %v313 = vadd.f32 %v137, %v312
    %314 = vdwg.mxu0
    %315 = vmatpush.bf16.msra.mxu0 %v267
    %316 = vmatpush.bf16.msra.mxu0 %v265
    %317 = vmatpush.bf16.msra.mxu0 %v263
    %318 = vmatpush.bf16.msra.mxu0 %v261
    %319 = vmatpush.bf16.msra.mxu0 %v259
    %320 = vmatpush.bf16.msra.mxu0 %v257
    %321 = vmatpush.bf16.msra.mxu0 %v255
    %322 = vmatpush.bf16.msra.mxu0 %v253
    %323 = vmatmul.bf16.gmra.mxu0 %v102
    %v324 = vpop.f32.mrf.mxu0
    %v325 = vadd.f32 %v311, %v324
    %v326 = vpop.f32.mrf.mxu0
    %v327 = vadd.f32 %v313, %v326
    %328 = vdwg.mxu0
    %329 = vmatpush.bf16.msra.mxu0 %v252
    %330 = vmatpush.bf16.msra.mxu0 %v250
    %331 = vmatpush.bf16.msra.mxu0 %v248
    %332 = vmatpush.bf16.msra.mxu0 %v246
    %333 = vmatpush.bf16.msra.mxu0 %v244
    %334 = vmatpush.bf16.msra.mxu0 %v242
    %335 = vmatpush.bf16.msra.mxu0 %v240
    %336 = vmatpush.bf16.msra.mxu0 %v238
    %337 = vmatmul.bf16.gmra.mxu0 %v101
    %v338 = vpop.f32.mrf.mxu0
    %v339 = vadd.f32 %v138, %v338
    %v340 = vpop.f32.mrf.mxu0
    %v341 = vadd.f32 %v138, %v340
    %342 = vdwg.mxu0
    %343 = vmatpush.bf16.msra.mxu0 %v268
    %344 = vmatpush.bf16.msra.mxu0 %v266
    %345 = vmatpush.bf16.msra.mxu0 %v264
    %346 = vmatpush.bf16.msra.mxu0 %v262
    %347 = vmatpush.bf16.msra.mxu0 %v260
    %348 = vmatpush.bf16.msra.mxu0 %v258
    %349 = vmatpush.bf16.msra.mxu0 %v256
    %350 = vmatpush.bf16.msra.mxu0 %v254
    %351 = vmatmul.bf16.gmra.mxu0 %v102
    %v352 = vpop.f32.mrf.mxu0
    %v353 = vadd.f32 %v339, %v352
    %v354 = vpop.f32.mrf.mxu0
    %v355 = vadd.f32 %v341, %v354
    %356 = vdwg.mxu0
    %v357 = vmax.f32 %v325, 0.0
    %v358 = vmax.f32 %v353, 0.0
    %v359 = vmax.f32 %v327, 0.0
    %v360 = vmax.f32 %v355, 0.0
    %v361 = vld [vmem:[%s5] sm:$0x3]
    %v362 = vpack.c.bf16 %v359, %v357
    %v363 = vpack.c.bf16 %v360, %v358
    %v364 = vld [vmem:[%s6] sm:$0x3]
    %366 = vset.pattern.permute.xlu0 0
    %367 = vperm.xlu0 %366, %v364
    %v368 = vpop.permute.xlu0 %367
    %371 = vst [vmem:[#allocation1] ss:$9 sm:$0xff] %v361
    %v372 = vld [vmem:[#allocation1] sm:$0xff]
    %v373 = vld [vmem:[#allocation1 + $0x9] sm:$0xff]
    %376 = vmatpush.bf16.xpose.msra.mxu0 0
    %377 = vmatpush.bf16.xpose.msra.mxu0 0
    %378 = vmatpush.bf16.xpose.msra.mxu0 0
    %379 = vmatpush.bf16.xpose.msra.mxu0 0
    %380 = vmatpush.bf16.xpose.msra.mxu0 0
    %381 = vmatpush.bf16.xpose.msra.mxu0 0
    %382 = vmatpush.bf16.xpose.msra.mxu0 0
    %383 = vmatpush.bf16.xpose.msra.mxu0 %v362
    %384 = vmatmul.bf16.gmra.mxu0 %v372
    %v385 = vpop.f32.mrf.mxu0
    %v386 = vadd.f32 %v368, %v385
    %v387 = vpop.f32.mrf.mxu0
    %388 = vdwg.mxu0
    %389 = vmatpush.bf16.xpose.msra.mxu0 0
    %390 = vmatpush.bf16.xpose.msra.mxu0 0
    %391 = vmatpush.bf16.xpose.msra.mxu0 0
    %392 = vmatpush.bf16.xpose.msra.mxu0 0
    %393 = vmatpush.bf16.xpose.msra.mxu0 0
    %394 = vmatpush.bf16.xpose.msra.mxu0 0
    %395 = vmatpush.bf16.xpose.msra.mxu0 0
    %396 = vmatpush.bf16.xpose.msra.mxu0 %v363
    %397 = vmatmul.bf16.gmra.mxu0 %v373
    %v398 = vpop.f32.mrf.mxu0
    %v399 = vadd.f32 %v386, %v398
    %v400 = vpop.f32.mrf.mxu0
    %401 = vdwg.mxu0
    %v402 = vlaneseq
    %v403 = vshrl.u32 %v402, 7
    %v404 = vtanh.pop %v399
    %v405 = vmul.f32 %v404, 3.5
    %v406 = vadd.f32 %v405, -1.5
    %vm407 = vcmp.eq.s32.totalorder %v403, 0
    %v408 = vsel %vm407, %v399, %v406
    %vm409 = vcmask 123904
    %410 = vst.msk [vmem:[%s7] sm:$0x3] %vm409, %v408
    // Predicated region
    $region34: #{actor_forward.1} parent=1 // pred_check
      _
    $region35: #{actor_forward.1} parent=1 // pred_check_branch
      %412 = sbr.rel (0) target = $region37
    $region36: #{actor_forward.1} parent=1 // pred_region
      _
    $region37: #{actor_forward.1} parent=1 // pred_fallthru
      _
    // Predicated region
    $region38: #{actor_forward.1} parent=1 // pred_check
      _
    $region39: #{actor_forward.1} parent=1 // pred_check_branch
      %414 = sbr.rel (0) target = $region41
    $region40: #{actor_forward.1} parent=1 // pred_region
      _
    $region41: #{actor_forward.1} parent=1 // pred_fallthru
      _
    %415 = vsyncpa [#allocation3], 1

</llo_original>
